<compile_context>
chip_gen: v5e
topology: v5e:2x2
jax: 0.10.0
libtpu: 0.0.40
codegen_flags: <defaults>
</compile_context>

<pallas_src>
import functools

import jax
import jax.numpy as jnp
from jax.experimental import pallas as pl
from jax.experimental.pallas import tpu as pltpu

IN_FEATURES = 300
OUT_FEATURES = 4


def _round_up(n, m):
    return ((n + m - 1) // m) * m


def linear_kernel(x_ref, w_ref, b_ref, o_ref):
    # x_ref: (bm, 300) f32, w_ref: (300, 4) f32, b_ref: (1, 4) f32,
    # o_ref: (bm, 4) f32. MXU matmul, f32 accumulate, bias add in f32.
    acc = jnp.dot(x_ref[...], w_ref[...], preferred_element_type=jnp.float32)
    o_ref[...] = acc + b_ref[...]


def linear_forward(x, w_t, b, *, block_batch=4096):
    """x: (B, 300) f32, w_t: (300, 4) f32, b: (1, 4) f32 -> (B, 4) f32."""
    B = x.shape[0]

    # Batch tile: multiple of 8 (f32 sublane), no larger than needed for small
    # batches. NOTE: for very large batches on v7x one could additionally cap
    # bm <= B/4 so megacore sharding keeps >=2 steps per TensorCore.
    bm = min(block_batch, _round_up(B, 8))
    grid = (pl.cdiv(B, bm),)  # ragged last block is masked by Pallas

    out = pl.pallas_call(
        linear_kernel,
        out_shape=jax.ShapeDtypeStruct((B, OUT_FEATURES), jnp.float32),
        grid=grid,
        in_specs=[
            # Streamed batch tiles of x — double-buffered by the pipeline.
            pl.BlockSpec((bm, IN_FEATURES), lambda i: (i, 0)),
            # Weight & bias: constant index_map -> resident, DMA'd once.
            pl.BlockSpec((IN_FEATURES, OUT_FEATURES), lambda i: (0, 0)),
            pl.BlockSpec((1, OUT_FEATURES), lambda i: (0, 0)),
        ],
        out_specs=pl.BlockSpec((bm, OUT_FEATURES), lambda i: (i, 0)),
        compiler_params=pltpu.CompilerParams(
            dimension_semantics=("parallel",),
            # ~17 MiB of double-buffered tiles at bm=4096 (f32, lane-padded);
            # raise scoped VMEM so v5e's 16 MiB default doesn't shrink buffering.
            vmem_limit_bytes=32 * 1024 * 1024,
        ),
    )(x, w_t, b)

    return out


# jit the whole forward so the transpose/reshape glue fuses with the call.
linear_forward_jit = jax.jit(
    functools.partial(linear_forward), static_argnames=("block_batch",)
)


def init_params(key):
    """Parameter init matching the PyTorch module.

    weight: (4, 300) xavier normal  (std = sqrt(2 / (fan_in + fan_out)))
    bias:   (4,) PyTorch Linear default U(-1/sqrt(fan_in), 1/sqrt(fan_in))
    """
    k_w, k_b = jax.random.split(key)
    std = (2.0 / (IN_FEATURES + OUT_FEATURES)) ** 0.5
    weight = jax.random.normal(k_w, (OUT_FEATURES, IN_FEATURES), jnp.float32) * std
    bound = 1.0 / (IN_FEATURES ** 0.5)
    bias = jax.random.uniform(
        k_b, (OUT_FEATURES,), jnp.float32, minval=-bound, maxval=bound
    )
    return weight, bias


if __name__ == "__main__":
    key = jax.random.PRNGKey(0)
    k_params, k_x = jax.random.split(key)

    weight, bias = init_params(k_params)

    batch = 8
    x = jax.random.normal(k_x, (batch, IN_FEATURES), jnp.float32)

    # Glue: transpose weight once, reshape bias for in-kernel broadcast.
    w_t = weight.T                        # (300, 4)
    b = bias.reshape(1, OUT_FEATURES)     # (1, 4)

    out = linear_forward_jit(x, w_t, b)
    jax.block_until_ready(out)

    # Full-f32 reference (exact semantics of the PyTorch forward).
    ref = x @ weight.T + bias

    assert out.shape == (batch, OUT_FEATURES)
    assert jnp.allclose(out, ref, atol=1e-4, rtol=1e-4)

    print("KERNEL_OK")
</pallas_src>

<mosaic_0001>
module attributes {stable_mosaic.version = 11 : i64} {
  func.func @linear_kernel(%arg0: i32, %arg1: memref<8x300xf32, #tpu.memory_space<vmem>>, %arg2: memref<300x4xf32, #tpu.memory_space<vmem>>, %arg3: memref<1x4xf32, #tpu.memory_space<vmem>>, %arg4: memref<8x4xf32, #tpu.memory_space<vmem>>) attributes {dimension_semantics = [#tpu.dimension_semantics<parallel>], iteration_bounds = array<i64: 1>, scalar_prefetch = 0 : i64, scratch_operands = 0 : i64, tpu.core_type = #tpu.core_type<tc>, window_params = [{transform_indices = @transform_0, window_bounds = array<i64: 8, 300>}, {pipeline_mode = #tpu.pipeline_mode<synchronous>, transform_indices = @transform_1, window_bounds = array<i64: 300, 4>}, {pipeline_mode = #tpu.pipeline_mode<synchronous>, transform_indices = @transform_2, window_bounds = array<i64: 1, 4>}, {transform_indices = @transform_3, window_bounds = array<i64: 8, 4>}]} {
    %c0 = arith.constant 0 : index
    %c0_0 = arith.constant 0 : index
    %0 = vector.load %arg1[%c0, %c0_0] : memref<8x300xf32, #tpu.memory_space<vmem>>, vector<8x300xf32>
    %c0_1 = arith.constant 0 : index
    %c0_2 = arith.constant 0 : index
    %1 = vector.load %arg2[%c0_1, %c0_2] : memref<300x4xf32, #tpu.memory_space<vmem>>, vector<300x4xf32>
    %cst = arith.constant dense<0.000000e+00> : vector<8x4xf32>
    %2 = tpu.matmul %0, %1, %cst {dimension_numbers = #tpu.dot_dimension_numbers<[1], [0], [0], [1], [0, 0, 1, 1], [], []>} : vector<8x300xf32>, vector<300x4xf32>, vector<8x4xf32> -> vector<8x4xf32>
    %c0_3 = arith.constant 0 : index
    %c0_4 = arith.constant 0 : index
    %3 = vector.load %arg3[%c0_3, %c0_4] : memref<1x4xf32, #tpu.memory_space<vmem>>, vector<1x4xf32>
    %4 = vector.broadcast %3 : vector<1x4xf32> to vector<8x4xf32>
    %5 = arith.addf %2, %4 : vector<8x4xf32>
    %c0_5 = arith.constant 0 : index
    %c0_6 = arith.constant 0 : index
    %6 = vector.load %arg4[%c0_5, %c0_6] : memref<8x4xf32, #tpu.memory_space<vmem>>, vector<8x4xf32>
    tpu.vector_store %arg4[%c0_5, %c0_6], %5 {strides = array<i32>} : memref<8x4xf32, #tpu.memory_space<vmem>>, vector<8x4xf32>,
    return
  }
  func.func @transform_0(%arg0: i32) -> (i32, i32) {
    %c0_i32 = arith.constant 0 : i32
    %c0_i32_0 = arith.constant 0 : i32
    return %arg0, %c0_i32 : i32, i32
  }
  func.func @transform_1(%arg0: i32) -> (i32, i32) {
    %c0_i32 = arith.constant 0 : i32
    %c0_i32_0 = arith.constant 0 : i32
    %c0_i32_1 = arith.constant 0 : i32
    return %c0_i32, %c0_i32_0 : i32, i32
  }
  func.func @transform_2(%arg0: i32) -> (i32, i32) {
    %c0_i32 = arith.constant 0 : i32
    %c0_i32_0 = arith.constant 0 : i32
    %c0_i32_1 = arith.constant 0 : i32
    return %c0_i32, %c0_i32_0 : i32, i32
  }
  func.func @transform_3(%arg0: i32) -> (i32, i32) {
    %c0_i32 = arith.constant 0 : i32
    %c0_i32_0 = arith.constant 0 : i32
    return %arg0, %c0_i32 : i32, i32
  }
}

</mosaic_0001>

<llo_original>
// kernel: linear_forward.1
$region0: #{linear_forward.1}
  #allocation0 [shape = 'u32[]', space=smem, size = 0x4, offset = 0x4, fixed_abs, tag = 'smem constant byte address 0x4 - core index']
  #allocation1 [shape = 'u32[72,128]{1,0:T(1,128)}', space=vmem, size = 0x9000, scoped, tag = 'internal scratch']
  %s0 = inlined_call_operand.vmem [shape: f32[8,300], index: 0, kind: input, shape index: {}]
  %s1 = inlined_call_operand.vmem [shape: f32[300,4], index: 1, kind: input, shape index: {}]
  %s2 = inlined_call_operand.vmem [shape: f32[1,4], index: 2, kind: input, shape index: {}]
  %s3 = inlined_call_operand.vmem [shape: f32[8,4], index: 3, kind: output, shape index: {}]
  %s4 = sld [smem:[#allocation0]]
  $region22: #{linear_forward.1} parent=0
    _
  %s6 = ssub.s32 1, %s4
  %s7 = scalar_select 0, %s6, %s4
  // Predicated region
  $region2: #{linear_forward.1} parent=0 // pred_check
    _
  $region3: #{linear_forward.1} parent=0 // pred_check_branch
    %9 = sbr.rel (0) target = $region5
  $region4: #{linear_forward.1} parent=0 // pred_region
    _
  $region5: #{linear_forward.1} parent=0 // pred_fallthru
    _
  // Predicated region
  $region6: #{linear_forward.1} parent=0 // pred_check
    _
  $region7: #{linear_forward.1} parent=0 // pred_check_branch
    %11 = sbr.rel (0) target = $region9
  $region8: #{linear_forward.1} parent=0 // pred_region
    _
  $region9: #{linear_forward.1} parent=0 // pred_fallthru
    _
  // Predicated region
  $region10: #{linear_forward.1} parent=0 // pred_check
    _
  $region11: #{linear_forward.1} parent=0 // pred_check_branch
    %13 = sbr.rel (0) target = $region13
  $region12: #{linear_forward.1} parent=0 // pred_region
    _
  $region13: #{linear_forward.1} parent=0 // pred_fallthru
    _
  %v14 = vld [vmem:[%s0] sm:$0xff]
  %v15 = vld [vmem:[%s0 + $0x8] sm:$0xff]
  %v16 = vld [vmem:[%s0 + $0x10] sm:$0xff]
  %v17 = vld [vmem:[%s1] sm:$0xff]
  %v18 = vld [vmem:[%s1 + $0x8] sm:$0xff]
  %v19 = vld [vmem:[%s1 + $0x10] sm:$0xff]
  %v20 = vld [vmem:[%s1 + $0x18] sm:$0xff]
  %v21 = vld [vmem:[%s1 + $0x20] sm:$0xff]
  %v22 = vld [vmem:[%s1 + $0x28] sm:$0xff]
  %v23 = vld [vmem:[%s1 + $0x30] sm:$0xff]
  %v24 = vld [vmem:[%s1 + $0x38] sm:$0xff]
  %v25 = vld [vmem:[%s1 + $0x40] sm:$0xff]
  %v26 = vld [vmem:[%s1 + $0x48] sm:$0xff]
  %v27 = vld [vmem:[%s1 + $0x50] sm:$0xff]
  %v28 = vld [vmem:[%s1 + $0x58] sm:$0xff]
  %v29 = vld [vmem:[%s1 + $0x60] sm:$0xff]
  %v30 = vld [vmem:[%s1 + $0x68] sm:$0xff]
  %v31 = vld [vmem:[%s1 + $0x70] sm:$0xff]
  %v32 = vld [vmem:[%s1 + $0x78] sm:$0xff]
  %v33 = vld [vmem:[%s1 + $0x80] sm:$0xff]
  %v34 = vld [vmem:[%s1 + $0x88] sm:$0xff]
  %v35 = vld [vmem:[%s1 + $0x90] sm:$0xff]
  %v36 = vld [vmem:[%s1 + $0x98] sm:$0xff]
  %v37 = vld [vmem:[%s1 + $0xa0] sm:$0xff]
  %v38 = vld [vmem:[%s1 + $0xa8] sm:$0xff]
  %v39 = vld [vmem:[%s1 + $0xb0] sm:$0xff]
  %v40 = vld [vmem:[%s1 + $0xb8] sm:$0xff]
  %v41 = vld [vmem:[%s1 + $0xc0] sm:$0xff]
  %v42 = vld [vmem:[%s1 + $0xc8] sm:$0xff]
  %v43 = vld [vmem:[%s1 + $0xd0] sm:$0xff]
  %v44 = vld [vmem:[%s1 + $0xd8] sm:$0xff]
  %v45 = vld [vmem:[%s1 + $0xe0] sm:$0xff]
  %v46 = vld [vmem:[%s1 + $0xe8] sm:$0xff]
  %v47 = vld [vmem:[%s1 + $0xf0] sm:$0xff]
  %v48 = vld [vmem:[%s1 + $0xf8] sm:$0xff]
  %v49 = vld [vmem:[%s1 + $0x100] sm:$0xff]
  %v50 = vld [vmem:[%s1 + $0x108] sm:$0xff]
  %v51 = vld [vmem:[%s1 + $0x110] sm:$0xff]
  %v52 = vld [vmem:[%s1 + $0x118] sm:$0xff]
  %v53 = vld [vmem:[%s1 + $0x120] sm:$0xff]
  %v54 = vld [vmem:[%s1 + $0x128] sm:$0xf]
  %v55 = vld [vmem:[%s2] sm:$0x1]
  %v57 = vperm.slane %v55, 0
  %vm59 = vcmask 359424
  %v61 = vsel %vm59, %v16, 0
  %vm63 = vcmask 1043456
  %v65 = vsel %vm63, %v54, 0
  %67 = vmatpush.msra.mxu0 %v32
  %68 = vmatpush.msra.mxu0 %v31
  %69 = vmatpush.msra.mxu0 %v30
  %70 = vmatpush.msra.mxu0 %v29
  %71 = vmatpush.msra.mxu0 %v28
  %72 = vmatpush.msra.mxu0 %v27
  %73 = vmatpush.msra.mxu0 %v26
  %74 = vmatpush.msra.mxu0 %v25
  %75 = vmatpush.msra.mxu0 %v24
  %76 = vmatpush.msra.mxu0 %v23
  %77 = vmatpush.msra.mxu0 %v22
  %78 = vmatpush.msra.mxu0 %v21
  %79 = vmatpush.msra.mxu0 %v20
  %80 = vmatpush.msra.mxu0 %v19
  %81 = vmatpush.msra.mxu0 %v18
  %82 = vmatpush.msra.mxu0 %v17
  %83 = vmatmul.f32.gmra.mxu0 %v14
  %v84 = vpop.f32.mrf.mxu0
  %v85 = vadd.f32 %v57, %v84
  %86 = vdwg.mxu0
  %87 = vmatpush.msra.mxu0 %v48
  %88 = vmatpush.msra.mxu0 %v47
  %89 = vmatpush.msra.mxu0 %v46
  %90 = vmatpush.msra.mxu0 %v45
  %91 = vmatpush.msra.mxu0 %v44
  %92 = vmatpush.msra.mxu0 %v43
  %93 = vmatpush.msra.mxu0 %v42
  %94 = vmatpush.msra.mxu0 %v41
  %95 = vmatpush.msra.mxu0 %v40
  %96 = vmatpush.msra.mxu0 %v39
  %97 = vmatpush.msra.mxu0 %v38
  %98 = vmatpush.msra.mxu0 %v37
  %99 = vmatpush.msra.mxu0 %v36
  %100 = vmatpush.msra.mxu0 %v35
  %101 = vmatpush.msra.mxu0 %v34
  %102 = vmatpush.msra.mxu0 %v33
  %103 = vmatmul.f32.gmra.mxu0 %v15
  %v104 = vpop.f32.mrf.mxu0
  %v105 = vadd.f32 %v85, %v104
  %106 = vdwg.mxu0
  %107 = vmatpush.msra.mxu0 0.0
  %108 = vmatpush.msra.mxu0 0.0
  %109 = vmatpush.msra.mxu0 0.0
  %110 = vmatpush.msra.mxu0 0.0
  %111 = vmatpush.msra.mxu0 0.0
  %112 = vmatpush.msra.mxu0 0.0
  %113 = vmatpush.msra.mxu0 0.0
  %114 = vmatpush.msra.mxu0 0.0
  %115 = vmatpush.msra.mxu0 0.0
  %116 = vmatpush.msra.mxu0 0.0
  %117 = vmatpush.msra.mxu0 %v65
  %118 = vmatpush.msra.mxu0 %v53
  %119 = vmatpush.msra.mxu0 %v52
  %120 = vmatpush.msra.mxu0 %v51
  %121 = vmatpush.msra.mxu0 %v50
  %122 = vmatpush.msra.mxu0 %v49
  %123 = vmatmul.f32.gmra.mxu0 %v61
  %v124 = vpop.f32.mrf.mxu0
  %v125 = vadd.f32 %v105, %v124
  %126 = vdwg.mxu0
  %vm127 = vcmask 31744
  %128 = vst.msk [vmem:[%s3] sm:$0xff] %vm127, %v125
  // Predicated region
  $region14: #{linear_forward.1} parent=0 // pred_check
    _
  $region15: #{linear_forward.1} parent=0 // pred_check_branch
    %130 = sbr.rel (0) target = $region17
  $region16: #{linear_forward.1} parent=0 // pred_region
    _
  $region17: #{linear_forward.1} parent=0 // pred_fallthru
    _
  // Predicated region
  $region18: #{linear_forward.1} parent=0 // pred_check
    _
  $region19: #{linear_forward.1} parent=0 // pred_check_branch
    %132 = sbr.rel (0) target = $region21
  $region20: #{linear_forward.1} parent=0 // pred_region
    _
  $region21: #{linear_forward.1} parent=0 // pred_fallthru
    _

</llo_original>
